<compile_context>
chip_gen: v7x
topology: tpu7x:2x2x1
jax: 0.10.0
libtpu: 0.0.40
codegen_flags: <defaults>
</compile_context>

<pallas_src>
import functools

import jax
import jax.numpy as jnp
from jax import lax
from jax.experimental import pallas as pl
from jax.experimental.pallas import tpu as pltpu

_MIB = 1024 * 1024


def _round_up(n, m):
    return ((n + m - 1) // m) * m


def _cdiv(a, b):
    return (a + b - 1) // b


def _nbytes(a):
    return a.size * jnp.dtype(a.dtype).itemsize


# -----------------------------------------------------------------------------
# Generation-aware configuration (v5e/v6e: 128 MiB VMEM, 1 TC; v7x: 64 MiB, 2 TC)
# -----------------------------------------------------------------------------
def _device_kind():
    try:
        return jax.devices()[0].device_kind.lower()
    except Exception:
        return ""


def _vmem_capacity_bytes():
    try:
        return int(pltpu.get_tpu_info().vmem_capacity_bytes)
    except Exception:
        return 128 * _MIB


@functools.lru_cache(maxsize=None)
def _tpu_config():
    cap = _vmem_capacity_bytes()
    kind = _device_kind()
    # ~25% headroom for Mosaic-internal scratch; never more than 100 MiB.
    vmem_limit = max(32 * _MIB, min((cap * 3) // 4, 100 * _MIB))
    is_v7 = ("v7" in kind) or ("7x" in kind) or (cap <= 64 * _MIB)
    max_tm = 256 if is_v7 else 512
    return vmem_limit, max_tm, kind


def _preferred_lane(dim):
    """128-multiples everywhere; 256-multiples on v6e/v7x once the dim > 128."""
    kind = _tpu_config()[2]
    if dim > 128 and (("v6" in kind) or ("v7" in kind) or ("7x" in kind)):
        return 256
    return 128


def _choose_tile(Bp, max_tm):
    """Row tile minimizing padding; >=2 tiles when possible (megacore on v7x)."""
    min_tiles = 2 if Bp >= 16 else 1
    n_tiles = max(min_tiles, _cdiv(Bp, max_tm))
    tm = _round_up(_cdiv(Bp, n_tiles), 8)
    return tm, _round_up(Bp, tm)


def _const_spec(shape):
    """Constant-index block (weights/biases): resident in VMEM, single buffer."""
    return pl.BlockSpec(shape, lambda i: (0, 0), pipeline_mode=pl.Buffered(1))


# -----------------------------------------------------------------------------
# Single derivative evaluation:  ODEFunc.forward(t, x) = model(x)
# -----------------------------------------------------------------------------
def ode_mlp_kernel(x_ref, w1_ref, b1_ref, w2_ref, b2_ref, out_ref):
    """dx/dt = tanh(x @ W1 + b1) @ W2 + b2; bf16 MXU operands, f32 accum."""
    w1 = w1_ref[...]                                   # [Dp, Hp] bf16
    w2 = w2_ref[...]                                   # [Hp, Dp] bf16
    x = x_ref[...]                                     # [tm, Dp]
    h = jnp.dot(x.astype(w1.dtype), w1,
                preferred_element_type=jnp.float32)    # [tm, Hp] f32
    h = jnp.tanh(h + b1_ref[...])                      # f32 bias + tanh
    y = jnp.dot(h.astype(w2.dtype), w2,
                preferred_element_type=jnp.float32)    # [tm, Dp] f32
    out_ref[...] = (y + b2_ref[...]).astype(out_ref.dtype)


def ode_func_forward(t, x, params):
    """ODEFunc.forward: returns model(x); `t` is ignored (as in the module)."""
    del t
    w1, b1, w2, b2 = params                            # lane-padded (init_params)
    B, D = x.shape
    Dp, Hp = w1.shape
    vmem_limit, max_tm, _ = _tpu_config()

    Bp = _round_up(max(B, 8), 8)
    tm, Bp = _choose_tile(Bp, max_tm)

    needs_pad = (Bp != B) or (Dp != D)
    xp = jnp.pad(x, ((0, Bp - B), (0, Dp - D))) if needs_pad else x

    cost = pl.CostEstimate(
        flops=2 * Bp * (Dp * Hp + Hp * Dp),
        transcendentals=Bp * Hp,
        bytes_accessed=(_nbytes(xp) + _nbytes(w1) + _nbytes(b1)
                        + _nbytes(w2) + _nbytes(b2)
                        + Bp * Dp * jnp.dtype(x.dtype).itemsize),
    )

    out = pl.pallas_call(
        ode_mlp_kernel,
        out_shape=jax.ShapeDtypeStruct((Bp, Dp), x.dtype),
        grid_spec=pltpu.PrefetchScalarGridSpec(
            num_scalar_prefetch=0,
            grid=(Bp // tm,),
            in_specs=[
                pl.BlockSpec((tm, Dp), lambda i: (i, 0)),   # x: batch-tiled
                _const_spec((Dp, Hp)),                      # W1: resident, 1 buffer
                _const_spec((1, Hp)),                       # b1
                _const_spec((Hp, Dp)),                      # W2
                _const_spec((1, Dp)),                       # b2
            ],
            out_specs=pl.BlockSpec((tm, Dp), lambda i: (i, 0)),
        ),
        compiler_params=pltpu.CompilerParams(
            dimension_semantics=("parallel",),              # both TCs on v7x
            vmem_limit_bytes=vmem_limit,
        ),
        cost_estimate=cost,
    )(xp, w1, b1, w2, b2)
    return out[:B, :D] if needs_pad else out


# -----------------------------------------------------------------------------
# Amortized path: fixed-step RK4 integrator fused into ONE pallas_call.
# Grid = batch tiles ("parallel"); the whole time loop runs inside the kernel
# via an unrolled fori_loop, so per-step grid overhead disappears and the
# weights are DMA'd once per batch tile (single-buffered, VMEM resident).
# -----------------------------------------------------------------------------
def ode_rk4_kernel(x0_ref, w1_ref, b1_ref, w2_ref, b2_ref, out_ref,
                   *, dt, num_steps, unroll):
    w1 = w1_ref[...]
    b1 = b1_ref[...]
    w2 = w2_ref[...]
    b2 = b2_ref[...]

    def deriv(x):
        h = jnp.dot(x.astype(w1.dtype), w1, preferred_element_type=jnp.float32)
        h = jnp.tanh(h + b1)
        y = jnp.dot(h.astype(w2.dtype), w2, preferred_element_type=jnp.float32)
        return y + b2

    def rk4_step(_, x):
        # Incremental accumulation: only {x, acc, k} live simultaneously.
        k = deriv(x)                            # k1
        acc = x + (dt / 6.0) * k
        k = deriv(x + (0.5 * dt) * k)           # k2
        acc = acc + (dt / 3.0) * k
        k = deriv(x + (0.5 * dt) * k)           # k3
        acc = acc + (dt / 3.0) * k
        k = deriv(x + dt * k)                   # k4
        return acc + (dt / 6.0) * k

    x = x0_ref[...].astype(jnp.float32)
    x = lax.fori_loop(0, num_steps, rk4_step, x, unroll=unroll)
    out_ref[...] = x.astype(out_ref.dtype)


def ode_integrate_rk4(x0, params, *, dt, num_steps, unroll=4):
    """Integrate dx/dt = model(x) with fixed-step RK4, entirely in one kernel."""
    w1, b1, w2, b2 = params
    B, D = x0.shape
    Dp, Hp = w1.shape
    vmem_limit, max_tm, _ = _tpu_config()

    Bp = _round_up(max(B, 8), 8)
    tb, Bp = _choose_tile(Bp, max_tm)
    needs_pad = (Bp != B) or (Dp != D)
    x0p = jnp.pad(x0, ((0, Bp - B), (0, Dp - D))) if needs_pad else x0

    cost = pl.CostEstimate(
        flops=num_steps * 4 * 2 * Bp * (Dp * Hp + Hp * Dp),
        transcendentals=num_steps * 4 * Bp * Hp,
        bytes_accessed=(_nbytes(x0p) + _nbytes(w1) + _nbytes(b1)
                        + _nbytes(w2) + _nbytes(b2)
                        + Bp * Dp * jnp.dtype(x0.dtype).itemsize),
    )

    kernel = functools.partial(
        ode_rk4_kernel, dt=float(dt), num_steps=int(num_steps),
        unroll=max(1, min(int(unroll), int(num_steps))))

    out = pl.pallas_call(
        kernel,
        out_shape=jax.ShapeDtypeStruct((Bp, Dp), x0.dtype),
        grid_spec=pltpu.PrefetchScalarGridSpec(
            num_scalar_prefetch=0,
            grid=(Bp // tb,),
            in_specs=[
                pl.BlockSpec((tb, Dp), lambda i: (i, 0)),   # x0: batch-tiled
                _const_spec((Dp, Hp)),                      # W1
                _const_spec((1, Hp)),                       # b1
                _const_spec((Hp, Dp)),                      # W2
                _const_spec((1, Dp)),                       # b2
            ],
            out_specs=pl.BlockSpec((tb, Dp), lambda i: (i, 0)),
        ),
        compiler_params=pltpu.CompilerParams(
            dimension_semantics=("parallel",),              # batch tiles across TCs
            vmem_limit_bytes=vmem_limit,
        ),
        cost_estimate=cost,
    )(x0p, w1, b1, w2, b2)
    return out[:B, :D] if needs_pad else out


# -----------------------------------------------------------------------------
# Parameter construction: weights in bf16, lane-padded at init time.
# -----------------------------------------------------------------------------
def init_params(key, state_dim, hidden_dim, weight_dtype=jnp.bfloat16):
    Dp = _round_up(state_dim, _preferred_lane(state_dim))
    Hp = _round_up(hidden_dim, _preferred_lane(hidden_dim))
    k1, k2, k3, k4 = jax.random.split(key, 4)
    s1 = 1.0 / jnp.sqrt(state_dim)
    s2 = 1.0 / jnp.sqrt(hidden_dim)
    w1 = jax.random.normal(k1, (state_dim, hidden_dim), jnp.float32) * s1
    b1 = jax.random.normal(k2, (hidden_dim,), jnp.float32) * s1
    w2 = jax.random.normal(k3, (hidden_dim, state_dim), jnp.float32) * s2
    b2 = jax.random.normal(k4, (state_dim,), jnp.float32) * s2

    w1p = jnp.zeros((Dp, Hp), weight_dtype).at[:state_dim, :hidden_dim].set(
        w1.astype(weight_dtype))
    b1p = jnp.zeros((1, Hp), jnp.float32).at[0, :hidden_dim].set(b1)
    w2p = jnp.zeros((Hp, Dp), weight_dtype).at[:hidden_dim, :state_dim].set(
        w2.astype(weight_dtype))
    b2p = jnp.zeros((1, Dp), jnp.float32).at[0, :state_dim].set(b2)
    return (w1p, b1p, w2p, b2p)


# -----------------------------------------------------------------------------
# Pure-JAX reference mirroring the kernel's bf16 MXU / f32 elementwise math.
# -----------------------------------------------------------------------------
def _ref_deriv(x, params, state_dim, hidden_dim):
    w1p, b1p, w2p, b2p = params
    w1 = w1p[:state_dim, :hidden_dim].astype(jnp.float32)
    b1 = b1p[0, :hidden_dim]
    w2 = w2p[:hidden_dim, :state_dim].astype(jnp.float32)
    b2 = b2p[0, :state_dim]
    xb = x.astype(jnp.bfloat16).astype(jnp.float32)
    h = jnp.tanh(xb @ w1 + b1)
    hb = h.astype(jnp.bfloat16).astype(jnp.float32)
    return hb @ w2 + b2


if __name__ == "__main__":
    key = jax.random.PRNGKey(0)
    kx, kp = jax.random.split(key)

    batch, state_dim, hidden_dim = 8, 32, 64
    x = jax.random.normal(kx, (batch, state_dim), dtype=jnp.float32)
    t = jnp.float32(0.0)  # ignored by ODEFunc, as in the PyTorch module
    params = init_params(kp, state_dim, hidden_dim)

    # 1) Single derivative evaluation — exact ODEFunc.forward semantics.
    dxdt = ode_func_forward(t, x, params)
    dxdt = jax.block_until_ready(dxdt)
    ref = _ref_deriv(x, params, state_dim, hidden_dim)
    assert dxdt.shape == (batch, state_dim)
    assert jnp.allclose(dxdt, ref, atol=1e-2, rtol=1e-2), (
        float(jnp.max(jnp.abs(dxdt - ref))))

    # 2) Amortized solver path: RK4 over many steps fused inside one pallas_call.
    dt_step, num_steps = 0.1, 8
    x_final = ode_integrate_rk4(x, params, dt=dt_step, num_steps=num_steps)
    x_final = jax.block_until_ready(x_final)

    x_ref = x
    for _ in range(num_steps):
        k1 = _ref_deriv(x_ref, params, state_dim, hidden_dim)
        k2 = _ref_deriv(x_ref + 0.5 * dt_step * k1, params, state_dim, hidden_dim)
        k3 = _ref_deriv(x_ref + 0.5 * dt_step * k2, params, state_dim, hidden_dim)
        k4 = _ref_deriv(x_ref + dt_step * k3, params, state_dim, hidden_dim)
        x_ref = x_ref + (dt_step / 6.0) * (k1 + 2.0 * k2 + 2.0 * k3 + k4)

    assert x_final.shape == (batch, state_dim)
    assert jnp.allclose(x_final, x_ref, atol=2e-2, rtol=2e-2), (
        float(jnp.max(jnp.abs(x_final - x_ref))))

    print("KERNEL_OK")
</pallas_src>

<mosaic_0001>
module attributes {stable_mosaic.version = 11 : i64} {
  func.func @ode_mlp_kernel(%arg0: i32, %arg1: memref<8x128xf32, #tpu.memory_space<vmem>>, %arg2: memref<128x128xbf16, #tpu.memory_space<vmem>>, %arg3: memref<1x128xf32, #tpu.memory_space<vmem>>, %arg4: memref<128x128xbf16, #tpu.memory_space<vmem>>, %arg5: memref<1x128xf32, #tpu.memory_space<vmem>>, %arg6: memref<8x128xf32, #tpu.memory_space<vmem>>) attributes {dimension_semantics = [#tpu.dimension_semantics<parallel>], iteration_bounds = array<i64: 1>, scalar_prefetch = 0 : i64, scratch_operands = 0 : i64, tpu.core_type = #tpu.core_type<tc>, window_params = [{transform_indices = @transform_0, window_bounds = array<i64: 8, 128>}, {pipeline_mode = #tpu.pipeline_mode<synchronous>, transform_indices = @transform_1, window_bounds = array<i64: 128, 128>}, {pipeline_mode = #tpu.pipeline_mode<synchronous>, transform_indices = @transform_2, window_bounds = array<i64: 1, 128>}, {pipeline_mode = #tpu.pipeline_mode<synchronous>, transform_indices = @transform_3, window_bounds = array<i64: 128, 128>}, {pipeline_mode = #tpu.pipeline_mode<synchronous>, transform_indices = @transform_4, window_bounds = array<i64: 1, 128>}, {transform_indices = @transform_5, window_bounds = array<i64: 8, 128>}]} {
    %c0 = arith.constant 0 : index
    %c0_0 = arith.constant 0 : index
    %0 = vector.load %arg2[%c0, %c0_0] : memref<128x128xbf16, #tpu.memory_space<vmem>>, vector<128x128xbf16>
    %c0_1 = arith.constant 0 : index
    %c0_2 = arith.constant 0 : index
    %1 = vector.load %arg4[%c0_1, %c0_2] : memref<128x128xbf16, #tpu.memory_space<vmem>>, vector<128x128xbf16>
    %c0_3 = arith.constant 0 : index
    %c0_4 = arith.constant 0 : index
    %2 = vector.load %arg1[%c0_3, %c0_4] : memref<8x128xf32, #tpu.memory_space<vmem>>, vector<8x128xf32>
    %3 = arith.truncf %2 : vector<8x128xf32> to vector<8x128xbf16>
    %cst = arith.constant dense<0.000000e+00> : vector<8x128xf32>
    %4 = tpu.matmul %3, %0, %cst {dimension_numbers = #tpu.dot_dimension_numbers<[1], [0], [0], [1], [0, 0, 1, 1], [], []>} : vector<8x128xbf16>, vector<128x128xbf16>, vector<8x128xf32> -> vector<8x128xf32>
    %c0_5 = arith.constant 0 : index
    %c0_6 = arith.constant 0 : index
    %5 = vector.load %arg3[%c0_5, %c0_6] : memref<1x128xf32, #tpu.memory_space<vmem>>, vector<1x128xf32>
    %6 = vector.broadcast %5 : vector<1x128xf32> to vector<8x128xf32>
    %7 = arith.addf %4, %6 : vector<8x128xf32>
    %8 = math.tanh %7 : vector<8x128xf32>
    %9 = arith.truncf %8 : vector<8x128xf32> to vector<8x128xbf16>
    %cst_7 = arith.constant dense<0.000000e+00> : vector<8x128xf32>
    %10 = tpu.matmul %9, %1, %cst_7 {dimension_numbers = #tpu.dot_dimension_numbers<[1], [0], [0], [1], [0, 0, 1, 1], [], []>} : vector<8x128xbf16>, vector<128x128xbf16>, vector<8x128xf32> -> vector<8x128xf32>
    %c0_8 = arith.constant 0 : index
    %c0_9 = arith.constant 0 : index
    %11 = vector.load %arg5[%c0_8, %c0_9] : memref<1x128xf32, #tpu.memory_space<vmem>>, vector<1x128xf32>
    %12 = vector.broadcast %11 : vector<1x128xf32> to vector<8x128xf32>
    %13 = arith.addf %10, %12 : vector<8x128xf32>
    %c0_10 = arith.constant 0 : index
    %c0_11 = arith.constant 0 : index
    %14 = vector.load %arg6[%c0_10, %c0_11] : memref<8x128xf32, #tpu.memory_space<vmem>>, vector<8x128xf32>
    tpu.vector_store %arg6[%c0_10, %c0_11], %13 {strides = array<i32>} : memref<8x128xf32, #tpu.memory_space<vmem>>, vector<8x128xf32>,
    return
  }
  func.func @transform_0(%arg0: i32) -> (i32, i32) {
    %c0_i32 = arith.constant 0 : i32
    %c0_i32_0 = arith.constant 0 : i32
    return %arg0, %c0_i32 : i32, i32
  }
  func.func @transform_1(%arg0: i32) -> (i32, i32) {
    %c0_i32 = arith.constant 0 : i32
    %c0_i32_0 = arith.constant 0 : i32
    %c0_i32_1 = arith.constant 0 : i32
    return %c0_i32, %c0_i32_0 : i32, i32
  }
  func.func @transform_2(%arg0: i32) -> (i32, i32) {
    %c0_i32 = arith.constant 0 : i32
    %c0_i32_0 = arith.constant 0 : i32
    %c0_i32_1 = arith.constant 0 : i32
    return %c0_i32, %c0_i32_0 : i32, i32
  }
  func.func @transform_3(%arg0: i32) -> (i32, i32) {
    %c0_i32 = arith.constant 0 : i32
    %c0_i32_0 = arith.constant 0 : i32
    %c0_i32_1 = arith.constant 0 : i32
    return %c0_i32, %c0_i32_0 : i32, i32
  }
  func.func @transform_4(%arg0: i32) -> (i32, i32) {
    %c0_i32 = arith.constant 0 : i32
    %c0_i32_0 = arith.constant 0 : i32
    %c0_i32_1 = arith.constant 0 : i32
    return %c0_i32, %c0_i32_0 : i32, i32
  }
  func.func @transform_5(%arg0: i32) -> (i32, i32) {
    %c0_i32 = arith.constant 0 : i32
    %c0_i32_0 = arith.constant 0 : i32
    return %arg0, %c0_i32 : i32, i32
  }
}

</mosaic_0001>

<llo_original>
// kernel: tpu_custom_call.1
$region0: #{tpu_custom_call.1}
  #allocation0 [shape = 'u32[]', space=smem, size = 0x4, offset = 0x4, fixed_abs, tag = 'smem constant byte address 0x4 - core index']
  #allocation1 [shape = 'u32[144,128]{1,0:T(1,128)}', space=vmem, size = 0x12000, scoped, tag = 'internal scratch']
  %s0 = inlined_call_operand.hbm [shape: f32[8,128], index: 0, kind: input, shape index: {}]
  %s1 = inlined_call_operand.hbm [shape: bf16[128,128], index: 1, kind: input, shape index: {}]
  %s2 = inlined_call_operand.hbm [shape: f32[1,128], index: 2, kind: input, shape index: {}]
  %s3 = inlined_call_operand.hbm [shape: bf16[128,128], index: 3, kind: input, shape index: {}]
  %s4 = inlined_call_operand.hbm [shape: f32[1,128], index: 4, kind: input, shape index: {}]
  %s5 = inlined_call_operand.hbm [shape: f32[8,128], index: 5, kind: output, shape index: {}]
  %s6 = sld [smem:[#allocation0]]
  $region50: #{tpu_custom_call.1} parent=0
    _
  %s8 = ssub.s32 1, %s6
  %s9 = scalar_select 0, %s8, %s6
  $region1: #{tpu_custom_call.1} parent=0
    #allocation2 [shape = 'u8[4096]{0}', space=vmem, size = 0x1000, scoped, tag = 'input window, operand 0, single buffered']
    #allocation3 [shape = 's32[1]{0}', space=sflag, size = 0x4, scoped, tag = 'scoped memory for tpu_custom_call.1']
    #allocation4 [shape = 's32[1]{0}', space=sflag, size = 0x4, scoped, tag = 'scoped memory for tpu_custom_call.1']
    #allocation5 [shape = 'u8[32768]{0}', space=vmem, size = 0x8000, scoped, tag = 'input window, operand 1, single buffered']
    #allocation6 [shape = 's32[1]{0}', space=sflag, size = 0x4, scoped, tag = 'scoped memory for tpu_custom_call.1']
    #allocation7 [shape = 'u8[512]{0}', space=vmem, size = 0x400, scoped, tag = 'input window, operand 2, single buffered']
    #allocation8 [shape = 'u8[32768]{0}', space=vmem, size = 0x8000, scoped, tag = 'input window, operand 3, single buffered']
    #allocation9 [shape = 's32[1]{0}', space=sflag, size = 0x4, scoped, tag = 'scoped memory for tpu_custom_call.1']
    #allocation10 [shape = 'u8[512]{0}', space=vmem, size = 0x400, scoped, tag = 'input window, operand 4, single buffered']
    #allocation11 [shape = 'u8[4096]{0}', space=vmem, size = 0x1000, scoped, tag = 'output window, operand 0, single buffered']
    %10 = vsyncpa [#allocation3], 0
    %11 = vsyncpa [#allocation6], 0
    %12 = vsyncpa [#allocation9], 0
    %13 = vsyncpa [#allocation4], 0
    // Predicated region
    $region2: #{tpu_custom_call.1} parent=1 // pred_check
      _
    $region3: #{tpu_custom_call.1} parent=1 // pred_check_branch
      %15 = sbr.rel (0) target = $region5
    $region4: #{tpu_custom_call.1} parent=1 // pred_region
      %s17 = ssub.s32 128, 128
      %18 = vsyncadd [#allocation3], %s17
      %s20 = sshll.u32 [#allocation2], 4
      %s21 = int_to_ptr.vmem [resolvable:$true] %s20
      %23 = dma.hbm_to_vmem [thread:$0]  %s0, 128, %s21, [#allocation3]
    $region5: #{tpu_custom_call.1} parent=1 // pred_fallthru
      _
    // Predicated region
    $region6: #{tpu_custom_call.1} parent=1 // pred_check
      _
    $region7: #{tpu_custom_call.1} parent=1 // pred_check_branch
      %25 = sbr.rel (0) target = $region9
    $region8: #{tpu_custom_call.1} parent=1 // pred_region
      %s27 = ssub.s32 1024, 1024
      %28 = vsyncadd [#allocation6], %s27
      %s29 = sshll.u32 [#allocation5], 4
      %s30 = int_to_ptr.vmem [resolvable:$true] %s29
      %35 = dma.hbm_to_vmem [thread:$0]  %s1, 1024, %s30, [#allocation6], 64, 64, 4
    $region9: #{tpu_custom_call.1} parent=1 // pred_fallthru
      _
    // Predicated region
    $region10: #{tpu_custom_call.1} parent=1 // pred_check
      _
    $region11: #{tpu_custom_call.1} parent=1 // pred_check_branch
      %37 = sbr.rel (0) target = $region13
    $region12: #{tpu_custom_call.1} parent=1 // pred_region
      %s39 = ssub.s32 16, 16
      %40 = vsyncadd [#allocation6], %s39
      %s42 = sshll.u32 [#allocation7], 4
      %s43 = int_to_ptr.vmem [resolvable:$true] %s42
      %45 = dma.hbm_to_vmem [thread:$0]  %s2, 16, %s43, [#allocation6]
    $region13: #{tpu_custom_call.1} parent=1 // pred_fallthru
      _
    // Predicated region
    $region14: #{tpu_custom_call.1} parent=1 // pred_check
      _
    $region15: #{tpu_custom_call.1} parent=1 // pred_check_branch
      %47 = sbr.rel (0) target = $region17
    $region16: #{tpu_custom_call.1} parent=1 // pred_region
      %s49 = ssub.s32 1024, 1024
      %50 = vsyncadd [#allocation9], %s49
      %s51 = sshll.u32 [#allocation8], 4
      %s52 = int_to_ptr.vmem [resolvable:$true] %s51
      %57 = dma.hbm_to_vmem [thread:$0]  %s3, 1024, %s52, [#allocation9], 64, 64, 4
    $region17: #{tpu_custom_call.1} parent=1 // pred_fallthru
      _
    // Predicated region
    $region18: #{tpu_custom_call.1} parent=1 // pred_check
      _
    $region19: #{tpu_custom_call.1} parent=1 // pred_check_branch
      %59 = sbr.rel (0) target = $region21
    $region20: #{tpu_custom_call.1} parent=1 // pred_region
      %s61 = ssub.s32 16, 16
      %62 = vsyncadd [#allocation9], %s61
      %s64 = sshll.u32 [#allocation10], 4
      %s65 = int_to_ptr.vmem [resolvable:$true] %s64
      %67 = dma.hbm_to_vmem [thread:$0]  %s4, 16, %s65, [#allocation9]
    $region21: #{tpu_custom_call.1} parent=1 // pred_fallthru
      _
    // Predicated region
    $region22: #{tpu_custom_call.1} parent=1 // pred_check
      _
    $region23: #{tpu_custom_call.1} parent=1 // pred_check_branch
      %69 = sbr.rel (0) target = $region25
    $region24: #{tpu_custom_call.1} parent=1 // pred_region
      %70 = dma.done [#allocation3], 128
    $region25: #{tpu_custom_call.1} parent=1 // pred_fallthru
      _
    // Predicated region
    $region26: #{tpu_custom_call.1} parent=1 // pred_check
      _
    $region27: #{tpu_custom_call.1} parent=1 // pred_check_branch
      %72 = sbr.rel (0) target = $region29
    $region28: #{tpu_custom_call.1} parent=1 // pred_region
      %73 = dma.done [#allocation6], 1024
    $region29: #{tpu_custom_call.1} parent=1 // pred_fallthru
      _
    // Predicated region
    $region30: #{tpu_custom_call.1} parent=1 // pred_check
      _
    $region31: #{tpu_custom_call.1} parent=1 // pred_check_branch
      %75 = sbr.rel (0) target = $region33
    $region32: #{tpu_custom_call.1} parent=1 // pred_region
      %76 = dma.done [#allocation6], 16
    $region33: #{tpu_custom_call.1} parent=1 // pred_fallthru
      _
    // Predicated region
    $region34: #{tpu_custom_call.1} parent=1 // pred_check
      _
    $region35: #{tpu_custom_call.1} parent=1 // pred_check_branch
      %78 = sbr.rel (0) target = $region37
    $region36: #{tpu_custom_call.1} parent=1 // pred_region
      %79 = dma.done [#allocation9], 1024
    $region37: #{tpu_custom_call.1} parent=1 // pred_fallthru
      _
    // Predicated region
    $region38: #{tpu_custom_call.1} parent=1 // pred_check
      _
    $region39: #{tpu_custom_call.1} parent=1 // pred_check_branch
      %81 = sbr.rel (0) target = $region41
    $region40: #{tpu_custom_call.1} parent=1 // pred_region
      %82 = dma.done [#allocation9], 16
    $region41: #{tpu_custom_call.1} parent=1 // pred_fallthru
      _
    %v84 = vld [vmem:[#allocation5] sm:$0xf]
    %v85 = vld [vmem:[#allocation5 + $0x4] sm:$0xf]
    %v86 = vld [vmem:[#allocation5 + $0x8] sm:$0xf]
    %v87 = vld [vmem:[#allocation5 + $0xc] sm:$0xf]
    %v88 = vld [vmem:[#allocation5 + $0x10] sm:$0xf]
    %v89 = vld [vmem:[#allocation5 + $0x14] sm:$0xf]
    %v90 = vld [vmem:[#allocation5 + $0x18] sm:$0xf]
    %v91 = vld [vmem:[#allocation5 + $0x1c] sm:$0xf]
    %v92 = vld [vmem:[#allocation5 + $0x20] sm:$0xf]
    %v93 = vld [vmem:[#allocation5 + $0x24] sm:$0xf]
    %v94 = vld [vmem:[#allocation5 + $0x28] sm:$0xf]
    %v95 = vld [vmem:[#allocation5 + $0x2c] sm:$0xf]
    %v96 = vld [vmem:[#allocation5 + $0x30] sm:$0xf]
    %v97 = vld [vmem:[#allocation5 + $0x34] sm:$0xf]
    %v98 = vld [vmem:[#allocation5 + $0x38] sm:$0xf]
    %v99 = vld [vmem:[#allocation5 + $0x3c] sm:$0xf]
    %v100 = vld [vmem:[#allocation8] sm:$0xf]
    %v101 = vld [vmem:[#allocation8 + $0x4] sm:$0xf]
    %v102 = vld [vmem:[#allocation8 + $0x8] sm:$0xf]
    %v103 = vld [vmem:[#allocation8 + $0xc] sm:$0xf]
    %v104 = vld [vmem:[#allocation8 + $0x10] sm:$0xf]
    %v105 = vld [vmem:[#allocation8 + $0x14] sm:$0xf]
    %v106 = vld [vmem:[#allocation8 + $0x18] sm:$0xf]
    %v107 = vld [vmem:[#allocation8 + $0x1c] sm:$0xf]
    %v108 = vld [vmem:[#allocation8 + $0x20] sm:$0xf]
    %v109 = vld [vmem:[#allocation8 + $0x24] sm:$0xf]
    %v110 = vld [vmem:[#allocation8 + $0x28] sm:$0xf]
    %v111 = vld [vmem:[#allocation8 + $0x2c] sm:$0xf]
    %v112 = vld [vmem:[#allocation8 + $0x30] sm:$0xf]
    %v113 = vld [vmem:[#allocation8 + $0x34] sm:$0xf]
    %v114 = vld [vmem:[#allocation8 + $0x38] sm:$0xf]
    %v115 = vld [vmem:[#allocation8 + $0x3c] sm:$0xf]
    %v116 = vld [vmem:[#allocation2] sm:$0xff]
    %v117 = vpack.c.bf16 %v116, %v116
    %v118 = vld [vmem:[#allocation7] sm:$0x1]
    %v120 = vlaneseq
    %v121 = vshrl.u32 %v120, 7
    %v122 = vsub.s32 0, %v121
    %v123 = vrot.slane %v118, %v122
    %v141 = vunpack.c.l.b16 %v84
    %v142 = vunpack.c.l.b16 %v85
    %v143 = vunpack.c.l.b16 %v86
    %v144 = vunpack.c.l.b16 %v87
    %v145 = vunpack.c.l.b16 %v88
    %v146 = vunpack.c.l.b16 %v89
    %v147 = vunpack.c.l.b16 %v90
    %v148 = vunpack.c.l.b16 %v91
    %v149 = vunpack.c.l.b16 %v92
    %v150 = vunpack.c.l.b16 %v93
    %v151 = vunpack.c.l.b16 %v94
    %v152 = vunpack.c.l.b16 %v95
    %v153 = vunpack.c.l.b16 %v96
    %v154 = vunpack.c.l.b16 %v97
    %v155 = vunpack.c.l.b16 %v98
    %v156 = vunpack.c.l.b16 %v99
    %v157 = vpack.c.b16 %v142, %v141
    %v158 = vpack.c.b16 %v144, %v143
    %v159 = vpack.c.b16 %v146, %v145
    %v160 = vpack.c.b16 %v148, %v147
    %v161 = vpack.c.b16 %v150, %v149
    %v162 = vpack.c.b16 %v152, %v151
    %v163 = vpack.c.b16 %v154, %v153
    %v164 = vpack.c.b16 %v156, %v155
    %173 = vmatprep.subr.bf16.mxu0 0
    %174 = vmatpush1.bf16.msra.mxu0 %v157
    %175 = vmatprep.subr.bf16.mxu0 0
    %176 = vmatpush1.bf16.msra.mxu0 %v158
    %177 = vmatprep.subr.bf16.mxu0 0
    %178 = vmatpush1.bf16.msra.mxu0 %v159
    %179 = vmatprep.subr.bf16.mxu0 0
    %180 = vmatpush1.bf16.msra.mxu0 %v160
    %181 = vmatprep.subr.bf16.mxu0 0
    %182 = vmatpush1.bf16.msra.mxu0 %v161
    %183 = vmatprep.subr.bf16.mxu0 0
    %184 = vmatpush1.bf16.msra.mxu0 %v162
    %185 = vmatprep.subr.bf16.mxu0 0
    %186 = vmatpush1.bf16.msra.mxu0 %v163
    %187 = vmatprep.subr.bf16.mxu0 0
    %188 = vmatpush1.bf16.msra.mxu0 %v164
    %189 = vmatprep.subr.bf16.mxu0 0
    %190 = vmatpush1.bf16.msra.mxu0 0
    %191 = vmatprep.subr.bf16.mxu0 0
    %192 = vmatpush1.bf16.msra.mxu0 0
    %193 = vmatprep.subr.bf16.mxu0 0
    %194 = vmatpush1.bf16.msra.mxu0 0
    %195 = vmatprep.subr.bf16.mxu0 0
    %196 = vmatpush1.bf16.msra.mxu0 0
    %197 = vmatprep.subr.bf16.mxu0 0
    %198 = vmatpush1.bf16.msra.mxu0 0
    %199 = vmatprep.subr.bf16.mxu0 0
    %200 = vmatpush1.bf16.msra.mxu0 0
    %201 = vmatprep.subr.bf16.mxu0 0
    %202 = vmatpush1.bf16.msra.mxu0 0
    %203 = vmatprep.subr.bf16.mxu0 0
    %204 = vmatpush1.bf16.msra.mxu0 0
    %205 = vmatprep.mubr.bf16.mxu0 0
    %206 = vmatmul.mubr.bf16.gmra.mrb[0].mxu0 %v117
    %v207 = vpop.f32.mrb[0].mxu0
    %v208 = vadd.f32 %v123, %v207
    %v209 = vpop.f32.mrb[0].mxu0
    %v210 = vpop.f32.mrb[0].mxu0
    %v211 = vpop.f32.mrb[0].mxu0
    %212 = vdwg.mxu0
    %v213 = vtanh.pop %v208
    %v214 = vpack.c.bf16 %v213, %v213
    %v215 = vld [vmem:[#allocation10] sm:$0x1]
    %v217 = vlaneseq
    %v218 = vshrl.u32 %v217, 7
    %v219 = vsub.s32 0, %v218
    %v220 = vrot.slane %v215, %v219
    %v238 = vunpack.c.l.b16 %v100
    %v239 = vunpack.c.l.b16 %v101
    %v240 = vunpack.c.l.b16 %v102
    %v241 = vunpack.c.l.b16 %v103
    %v242 = vunpack.c.l.b16 %v104
    %v243 = vunpack.c.l.b16 %v105
    %v244 = vunpack.c.l.b16 %v106
    %v245 = vunpack.c.l.b16 %v107
    %v246 = vunpack.c.l.b16 %v108
    %v247 = vunpack.c.l.b16 %v109
    %v248 = vunpack.c.l.b16 %v110
    %v249 = vunpack.c.l.b16 %v111
    %v250 = vunpack.c.l.b16 %v112
    %v251 = vunpack.c.l.b16 %v113
    %v252 = vunpack.c.l.b16 %v114
    %v253 = vunpack.c.l.b16 %v115
    %v254 = vpack.c.b16 %v239, %v238
    %v255 = vpack.c.b16 %v241, %v240
    %v256 = vpack.c.b16 %v243, %v242
    %v257 = vpack.c.b16 %v245, %v244
    %v258 = vpack.c.b16 %v247, %v246
    %v259 = vpack.c.b16 %v249, %v248
    %v260 = vpack.c.b16 %v251, %v250
    %v261 = vpack.c.b16 %v253, %v252
    %270 = vmatprep.subr.bf16.mxu0 0
    %271 = vmatpush1.bf16.msra.mxu0 %v254
    %272 = vmatprep.subr.bf16.mxu0 0
    %273 = vmatpush1.bf16.msra.mxu0 %v255
    %274 = vmatprep.subr.bf16.mxu0 0
    %275 = vmatpush1.bf16.msra.mxu0 %v256
    %276 = vmatprep.subr.bf16.mxu0 0
    %277 = vmatpush1.bf16.msra.mxu0 %v257
    %278 = vmatprep.subr.bf16.mxu0 0
    %279 = vmatpush1.bf16.msra.mxu0 %v258
    %280 = vmatprep.subr.bf16.mxu0 0
    %281 = vmatpush1.bf16.msra.mxu0 %v259
    %282 = vmatprep.subr.bf16.mxu0 0
    %283 = vmatpush1.bf16.msra.mxu0 %v260
    %284 = vmatprep.subr.bf16.mxu0 0
    %285 = vmatpush1.bf16.msra.mxu0 %v261
    %286 = vmatprep.subr.bf16.mxu0 0
    %287 = vmatpush1.bf16.msra.mxu0 0
    %288 = vmatprep.subr.bf16.mxu0 0
    %289 = vmatpush1.bf16.msra.mxu0 0
    %290 = vmatprep.subr.bf16.mxu0 0
    %291 = vmatpush1.bf16.msra.mxu0 0
    %292 = vmatprep.subr.bf16.mxu0 0
    %293 = vmatpush1.bf16.msra.mxu0 0
    %294 = vmatprep.subr.bf16.mxu0 0
    %295 = vmatpush1.bf16.msra.mxu0 0
    %296 = vmatprep.subr.bf16.mxu0 0
    %297 = vmatpush1.bf16.msra.mxu0 0
    %298 = vmatprep.subr.bf16.mxu0 0
    %299 = vmatpush1.bf16.msra.mxu0 0
    %300 = vmatprep.subr.bf16.mxu0 0
    %301 = vmatpush1.bf16.msra.mxu0 0
    %302 = vmatprep.mubr.bf16.mxu0 0
    %303 = vmatmul.mubr.bf16.gmra.mrb[0].mxu0 %v214
    %v304 = vpop.f32.mrb[0].mxu0
    %v305 = vadd.f32 %v220, %v304
    %v306 = vpop.f32.mrb[0].mxu0
    %v307 = vpop.f32.mrb[0].mxu0
    %v308 = vpop.f32.mrb[0].mxu0
    %309 = vdwg.mxu0
    %310 = vst [vmem:[#allocation11] sm:$0xff] %v305
    // Predicated region
    $region42: #{tpu_custom_call.1} parent=1 // pred_check
      _
    $region43: #{tpu_custom_call.1} parent=1 // pred_check_branch
      %312 = sbr.rel (0) target = $region45
    $region44: #{tpu_custom_call.1} parent=1 // pred_region
      %s314 = ssub.s32 128, 128
      %315 = vsyncadd [#allocation4], %s314
      %s317 = sshll.u32 [#allocation11], 4
      %s318 = int_to_ptr.vmem [resolvable:$true] %s317
      %320 = dma.vmem_to_hbm [thread:$0]  %s318, 128, %s5, [#allocation4]
    $region45: #{tpu_custom_call.1} parent=1 // pred_fallthru
      _
    // Predicated region
    $region46: #{tpu_custom_call.1} parent=1 // pred_check
      _
    $region47: #{tpu_custom_call.1} parent=1 // pred_check_branch
      %322 = sbr.rel (0) target = $region49
    $region48: #{tpu_custom_call.1} parent=1 // pred_region
      %323 = dma.done [#allocation4], 128
    $region49: #{tpu_custom_call.1} parent=1 // pred_fallthru
      _
    %324 = vsyncpa [#allocation3], 1
    %325 = vsyncpa [#allocation6], 1
    %326 = vsyncpa [#allocation9], 1
    %327 = vsyncpa [#allocation4], 1

</llo_original>
